<compile_context>
chip_gen: v7x
topology: tpu7x:2x2x1
jax: 0.10.0
libtpu: 0.0.40
codegen_flags: <defaults>
</compile_context>

<pallas_src>
import jax
import jax.numpy as jnp
from jax import lax
from jax.experimental import pallas as pl
from jax.experimental.pallas import tpu as pltpu

# ---------------- configuration (small, consistent with the module) ----------
B = 2            # batch
C = 3            # image channels
IMG = 16         # image height = width
P = 4            # patch size
NP = (IMG // P) ** 2          # 16 patches
PD = C * P * P                # 48 = flattened patch dim
H = 32           # hidden_size (text_encoder.hidden_size == image hidden_size)
V = 64           # vocab size (len(tokenizer))
VP = 128         # vocab padded to one full lane tile (lane-dense output)
L = 8            # label sequence length -> T = L - 1 teacher-forcing steps
T = L - 1
TB = T * B       # 14 time-major rows
PAD_ID = 0       # tokenizer.pad_token_id
BOS_ID = 1       # tokenizer.bos_token_id
NEG_PAD = -1e30  # bias for padded vocab columns (kills them in the softmax)

F32 = jnp.float32
BF16 = jnp.bfloat16
VMEM = pltpu.MemorySpace.VMEM
SMEM = pltpu.MemorySpace.SMEM


# ---------------- fused kernel: image enc + embed + LSTM + proj + CE loss ----
def fused_kernel(patches_ref, pslab_ref, tok_ref, wslab_ref, bslab_ref,
                 logits_ref, loss_ref):
    # ---- image encoder: single 2D patch-embed matmul + mean-pool "CLS" ----
    w_patch = pslab_ref[:PD, :]                       # (PD, H)
    b_patch = pslab_ref[PD:PD + 1, :]                 # (1, H)
    emb_img = jnp.dot(patches_ref[...], w_patch,
                      preferred_element_type=F32) + b_patch      # (B*NP, H)
    row = lax.broadcasted_iota(jnp.int32, (B, B * NP), 0)
    col = lax.broadcasted_iota(jnp.int32, (B, B * NP), 1)
    pool = ((col >= row * NP) & (col < (row + 1) * NP)).astype(F32) * (1.0 / NP)
    cls = jnp.dot(pool, emb_img, preferred_element_type=F32)      # (B, H)

    # ---- prepare_states: identity -> h0 = c0 = cls ----

    # ---- weight / bias slab views (static slices, zero-cost) ----
    emb_proj = wslab_ref[0:V, :]                      # (V, 4H)  = emb @ W_ih^T
    whh = wslab_ref[V:V + H, :]                       # (H, 4H)  = W_hh^T
    wout = wslab_ref[V + H:V + 2 * H, :]              # (H, VP)  padded W_out^T
    b_gates = bslab_ref[0:1, :]                       # (1, 4H)  = b_ih + b_hh
    b_out = bslab_ref[1:2, :]                         # (1, VP)

    # ---- tokens (time-major, row n = t*B + b) ----
    tok = tok_ref[...]                                # (TB, 2) int32
    shifted = tok[:, 0:1]
    targets = tok[:, 1:2]

    # ---- hoisted embedding+input projection for ALL T steps (one matmul) ----
    onehot_x = (shifted ==
                lax.broadcasted_iota(jnp.int32, (TB, V), 1)).astype(F32)   # (TB, V)
    x_proj = (jnp.dot(onehot_x, emb_proj, preferred_element_type=F32)
              + b_gates)                                                    # (TB, 4H)

    # ---- recurrence: fully unrolled, h/c live in vregs (PyTorch gate order
    # i|f|g|o).  ONE fused (B,H)x(H,4H) bf16 dot per step on the serial chain.
    whh_bf = whh.astype(BF16)
    h = cls
    c = cls
    hs = []
    for t in range(T):
        z = x_proj[t * B:(t + 1) * B, :] + jnp.dot(
            h.astype(BF16), whh_bf, preferred_element_type=F32)             # (B, 4H)
        sig = jax.nn.sigmoid(z)      # one EUP issue covers i/f/o lanes
        th = jnp.tanh(z)             # one EUP issue covers g lanes
        i_g = sig[:, 0 * H:1 * H]
        f_g = sig[:, 1 * H:2 * H]
        g_g = th[:, 2 * H:3 * H]
        o_g = sig[:, 3 * H:4 * H]
        c = f_g * c + i_g * g_g
        h = o_g * jnp.tanh(c)
        hs.append(h)

    # ---- hoisted vocab projection, lane-dense (TB, 128) output ----
    h_all = jnp.concatenate(hs, axis=0)                                     # (TB, H)
    logits = (jnp.dot(h_all, wout, preferred_element_type=F32) + b_out)     # (TB, VP)
    logits_ref[...] = logits

    # ---- cross-entropy with ignore_index = PAD_ID (mean over non-pad) ----
    m = jnp.max(logits, axis=-1, keepdims=True)
    lse = m + jnp.log(jnp.sum(jnp.exp(logits - m), axis=-1, keepdims=True))
    onehot_t = (targets == lax.broadcasted_iota(jnp.int32, (TB, VP), 1)).astype(F32)
    picked = jnp.sum(onehot_t * logits, axis=-1, keepdims=True)             # (TB, 1)
    mask = (targets != PAD_ID).astype(F32)
    total = jnp.sum(mask * (lse - picked))
    count = jnp.sum(mask)
    loss_ref[0, 0] = total / jnp.maximum(count, 1.0)


def fused_forward(patches, pslab, tok_tm, wslab, bslab):
    return pl.pallas_call(
        fused_kernel,
        out_shape=(jax.ShapeDtypeStruct((TB, VP), F32),
                   jax.ShapeDtypeStruct((1, 1), F32)),
        in_specs=[pl.BlockSpec(memory_space=VMEM)] * 5,
        out_specs=(pl.BlockSpec(memory_space=VMEM),
                   pl.BlockSpec(memory_space=SMEM)),
    )(patches, pslab, tok_tm, wslab, bslab)


# ---------------- parameters (deterministic, synthetic) ----------------------
def init_params(key):
    ks = jax.random.split(key, 8)
    s = 0.1
    return dict(
        w_patch=jax.random.normal(ks[0], (PD, H), F32) * s,
        b_patch=jax.random.normal(ks[1], (1, H), F32) * s,
        emb=jax.random.normal(ks[2], (V, H), F32) * s,
        wih_t=jax.random.normal(ks[3], (H, 4 * H), F32) * s,    # W_ih.T
        whh_t=jax.random.normal(ks[4], (H, 4 * H), F32) * s,    # W_hh.T
        # NOTE: stands in for (b_ih + b_hh) -- sum the two when porting real
        # PyTorch weights.
        b_gates=jax.random.normal(ks[5], (1, 4 * H), F32) * s,
        w_out=jax.random.normal(ks[6], (H, V), F32) * s,
        b_out=jax.random.normal(ks[7], (1, V), F32) * s,
    )


# ---------------- full forward (training branch of the module) ---------------
def show_and_tell_forward(params, pixel_values, labels):
    # NCHW -> (B*NP, PD) flattened 4x4 patches (layout plumbing only; the
    # patch-embed matmul itself runs inside the kernel).
    x = pixel_values.reshape(B, C, IMG // P, P, IMG // P, P)
    patches = x.transpose(0, 2, 4, 1, 3, 5).reshape(B * NP, PD)

    # --- _shift_labels ---
    shifted = labels[..., :-1].astype(jnp.int32)     # (B, T) inputs
    targets = labels[..., 1:].astype(jnp.int32)      # (B, T) targets
    # time-major rows (row n = t*B + b), packed into one (TB, 2) operand
    tok_tm = jnp.stack([shifted.T.reshape(TB), targets.T.reshape(TB)], axis=1)

    # Fold embedding into the input projection OUTSIDE the kernel (XLA fuses
    # this (64,32)x(32,128) matmul; it is off the critical path).
    emb_proj = params["emb"] @ params["wih_t"]                         # (V, 4H)

    # Pad the vocab projection to a lane-dense 128-wide output.  Padded
    # columns get weight 0 and bias -1e30 so they never influence the
    # softmax / LSE; the wrapper slices them back off.
    wout_pad = jnp.zeros((H, VP), F32).at[:, :V].set(params["w_out"])
    bout_pad = jnp.full((1, VP), NEG_PAD, F32).at[:, :V].set(params["b_out"])

    # Pack small weights into few slabs (cuts per-operand DMA setup cost).
    wslab = jnp.concatenate([emb_proj, params["whh_t"], wout_pad], axis=0)  # (128,128)
    bslab = jnp.concatenate([params["b_gates"], bout_pad], axis=0)          # (2,128)
    pslab = jnp.concatenate([params["w_patch"], params["b_patch"]], axis=0)  # (49,32)

    logits_full, loss = fused_forward(patches, pslab, tok_tm, wslab, bslab)

    logits = logits_full[:, :V].reshape(T, B, V).transpose(1, 0, 2)  # (B, T, V)
    return logits, loss[0, 0]


# ---------------- main --------------------------------------------------------
if __name__ == "__main__":
    key = jax.random.PRNGKey(0)
    kp, kx, kl = jax.random.split(key, 3)

    params = init_params(kp)

    pixel_values = jax.random.normal(kx, (B, C, IMG, IMG), F32)   # NCHW

    # labels: [BOS, tok, tok, ..., PAD, PAD]  (B, L) int32
    body = jax.random.randint(kl, (B, L), 3, V, dtype=jnp.int32)
    labels = body.at[:, 0].set(BOS_ID)
    labels = labels.at[:, -2:].set(PAD_ID)

    fwd = jax.jit(show_and_tell_forward)
    logits, loss = fwd(params, pixel_values, labels)
    jax.block_until_ready(logits)
    jax.block_until_ready(loss)

    assert logits.shape == (B, T, V)
    assert loss.shape == ()
    assert bool(jnp.isfinite(loss))
    print("KERNEL_OK")
</pallas_src>

<mosaic_0001>
module attributes {stable_mosaic.version = 11 : i64} {
  func.func @fused_kernel(%arg0: memref<32x48xf32, #tpu.memory_space<vmem>>, %arg1: memref<49x32xf32, #tpu.memory_space<vmem>>, %arg2: memref<14x2xi32, #tpu.memory_space<vmem>>, %arg3: memref<128x128xf32, #tpu.memory_space<vmem>>, %arg4: memref<2x128xf32, #tpu.memory_space<vmem>>, %arg5: memref<14x128xf32, #tpu.memory_space<vmem>>, %arg6: memref<1x1xf32, #tpu.memory_space<smem>>) attributes {dimension_semantics = [], scalar_prefetch = 0 : i64, scratch_operands = 0 : i64, tpu.core_type = #tpu.core_type<tc>} {
    %c0 = arith.constant 0 : index
    %c0_0 = arith.constant 0 : index
    %0 = vector.load %arg1[%c0, %c0_0] : memref<49x32xf32, #tpu.memory_space<vmem>>, vector<48x32xf32>
    %c48 = arith.constant 48 : index
    %c0_1 = arith.constant 0 : index
    %1 = vector.load %arg1[%c48, %c0_1] : memref<49x32xf32, #tpu.memory_space<vmem>>, vector<1x32xf32>
    %c0_2 = arith.constant 0 : index
    %c0_3 = arith.constant 0 : index
    %2 = vector.load %arg0[%c0_2, %c0_3] : memref<32x48xf32, #tpu.memory_space<vmem>>, vector<32x48xf32>
    %cst = arith.constant dense<0.000000e+00> : vector<32x32xf32>
    %3 = tpu.matmul %2, %0, %cst {dimension_numbers = #tpu.dot_dimension_numbers<[1], [0], [0], [1], [0, 0, 1, 1], [], []>} : vector<32x48xf32>, vector<48x32xf32>, vector<32x32xf32> -> vector<32x32xf32>
    %4 = vector.broadcast %1 : vector<1x32xf32> to vector<32x32xf32>
    %5 = arith.addf %3, %4 : vector<32x32xf32>
    %6 = tpu.iota {dimensions = array<i32: 0>} : vector<2x32xi32>
    %7 = tpu.iota {dimensions = array<i32: 1>} : vector<2x32xi32>
    %c16_i32 = arith.constant 16 : i32
    %8 = vector.broadcast %c16_i32 : i32 to vector<2x32xi32>
    %9 = arith.muli %6, %8 : vector<2x32xi32>
    %10 = arith.cmpi sge, %7, %9 : vector<2x32xi32>
    %c1_i32 = arith.constant 1 : i32
    %11 = vector.broadcast %c1_i32 : i32 to vector<2x32xi32>
    %12 = arith.addi %6, %11 : vector<2x32xi32>
    %c16_i32_4 = arith.constant 16 : i32
    %13 = vector.broadcast %c16_i32_4 : i32 to vector<2x32xi32>
    %14 = arith.muli %12, %13 : vector<2x32xi32>
    %15 = arith.cmpi slt, %7, %14 : vector<2x32xi32>
    %16 = arith.andi %10, %15 : vector<2x32xi1>
    %17 = arith.extui %16 : vector<2x32xi1> to vector<2x32xi32>
    %18 = arith.sitofp %17 : vector<2x32xi32> to vector<2x32xf32>
    %cst_5 = arith.constant 6.250000e-02 : f32
    %19 = vector.broadcast %cst_5 : f32 to vector<2x32xf32>
    %20 = arith.mulf %18, %19 : vector<2x32xf32>
    %cst_6 = arith.constant dense<0.000000e+00> : vector<2x32xf32>
    %21 = tpu.matmul %20, %5, %cst_6 {dimension_numbers = #tpu.dot_dimension_numbers<[1], [0], [0], [1], [0, 0, 1, 1], [], []>} : vector<2x32xf32>, vector<32x32xf32>, vector<2x32xf32> -> vector<2x32xf32>
    %c0_7 = arith.constant 0 : index
    %c0_8 = arith.constant 0 : index
    %22 = vector.load %arg3[%c0_7, %c0_8] : memref<128x128xf32, #tpu.memory_space<vmem>>, vector<64x128xf32>
    %c64 = arith.constant 64 : index
    %c0_9 = arith.constant 0 : index
    %23 = vector.load %arg3[%c64, %c0_9] : memref<128x128xf32, #tpu.memory_space<vmem>>, vector<32x128xf32>
    %c96 = arith.constant 96 : index
    %c0_10 = arith.constant 0 : index
    %24 = vector.load %arg3[%c96, %c0_10] : memref<128x128xf32, #tpu.memory_space<vmem>>, vector<32x128xf32>
    %c0_11 = arith.constant 0 : index
    %c0_12 = arith.constant 0 : index
    %25 = vector.load %arg4[%c0_11, %c0_12] : memref<2x128xf32, #tpu.memory_space<vmem>>, vector<1x128xf32>
    %c1 = arith.constant 1 : index
    %c0_13 = arith.constant 0 : index
    %26 = vector.load %arg4[%c1, %c0_13] : memref<2x128xf32, #tpu.memory_space<vmem>>, vector<1x128xf32>
    %c0_14 = arith.constant 0 : index
    %c0_15 = arith.constant 0 : index
    %27 = vector.load %arg2[%c0_14, %c0_15] : memref<14x2xi32, #tpu.memory_space<vmem>>, vector<14x2xi32>
    %28 = vector.extract_strided_slice %27 {offsets = [0, 0], sizes = [14, 1], strides = [1, 1]} : vector<14x2xi32> to vector<14x1xi32>
    %29 = vector.extract_strided_slice %27 {offsets = [0, 1], sizes = [14, 1], strides = [1, 1]} : vector<14x2xi32> to vector<14x1xi32>
    %30 = tpu.iota {dimensions = array<i32: 1>} : vector<14x64xi32>
    %31 = vector.broadcast %28 : vector<14x1xi32> to vector<14x64xi32>
    %32 = arith.cmpi eq, %31, %30 : vector<14x64xi32>
    %33 = arith.extui %32 : vector<14x64xi1> to vector<14x64xi32>
    %34 = arith.sitofp %33 : vector<14x64xi32> to vector<14x64xf32>
    %cst_16 = arith.constant dense<0.000000e+00> : vector<14x128xf32>
    %35 = tpu.matmul %34, %22, %cst_16 {dimension_numbers = #tpu.dot_dimension_numbers<[1], [0], [0], [1], [0, 0, 1, 1], [], []>} : vector<14x64xf32>, vector<64x128xf32>, vector<14x128xf32> -> vector<14x128xf32>
    %36 = vector.broadcast %25 : vector<1x128xf32> to vector<14x128xf32>
    %37 = arith.addf %35, %36 : vector<14x128xf32>
    %38 = arith.truncf %23 : vector<32x128xf32> to vector<32x128xbf16>
    %39 = vector.extract_strided_slice %37 {offsets = [0, 0], sizes = [2, 128], strides = [1, 1]} : vector<14x128xf32> to vector<2x128xf32>
    %40 = arith.truncf %21 : vector<2x32xf32> to vector<2x32xbf16>
    %cst_17 = arith.constant dense<0.000000e+00> : vector<2x128xf32>
    %41 = tpu.matmul %40, %38, %cst_17 {dimension_numbers = #tpu.dot_dimension_numbers<[1], [0], [0], [1], [0, 0, 1, 1], [], []>} : vector<2x32xbf16>, vector<32x128xbf16>, vector<2x128xf32> -> vector<2x128xf32>
    %42 = arith.addf %39, %41 : vector<2x128xf32>
    %43 = arith.negf %42 : vector<2x128xf32>
    %44 = math.exp %43 : vector<2x128xf32>
    %cst_18 = arith.constant 1.000000e+00 : f32
    %45 = vector.broadcast %cst_18 : f32 to vector<2x128xf32>
    %46 = arith.addf %45, %44 : vector<2x128xf32>
    %47 = arith.divf %45, %46 : vector<2x128xf32>
    %48 = math.tanh %42 : vector<2x128xf32>
    %49 = vector.extract_strided_slice %47 {offsets = [0, 0], sizes = [2, 32], strides = [1, 1]} : vector<2x128xf32> to vector<2x32xf32>
    %50 = vector.extract_strided_slice %47 {offsets = [0, 32], sizes = [2, 32], strides = [1, 1]} : vector<2x128xf32> to vector<2x32xf32>
    %51 = vector.extract_strided_slice %48 {offsets = [0, 64], sizes = [2, 32], strides = [1, 1]} : vector<2x128xf32> to vector<2x32xf32>
    %52 = vector.extract_strided_slice %47 {offsets = [0, 96], sizes = [2, 32], strides = [1, 1]} : vector<2x128xf32> to vector<2x32xf32>
    %53 = arith.mulf %50, %21 : vector<2x32xf32>
    %54 = arith.mulf %49, %51 : vector<2x32xf32>
    %55 = arith.addf %53, %54 : vector<2x32xf32>
    %56 = math.tanh %55 : vector<2x32xf32>
    %57 = arith.mulf %52, %56 : vector<2x32xf32>
    %58 = vector.extract_strided_slice %37 {offsets = [2, 0], sizes = [2, 128], strides = [1, 1]} : vector<14x128xf32> to vector<2x128xf32>
    %59 = arith.truncf %57 : vector<2x32xf32> to vector<2x32xbf16>
    %cst_19 = arith.constant dense<0.000000e+00> : vector<2x128xf32>
    %60 = tpu.matmul %59, %38, %cst_19 {dimension_numbers = #tpu.dot_dimension_numbers<[1], [0], [0], [1], [0, 0, 1, 1], [], []>} : vector<2x32xbf16>, vector<32x128xbf16>, vector<2x128xf32> -> vector<2x128xf32>
    %61 = arith.addf %58, %60 : vector<2x128xf32>
    %62 = arith.negf %61 : vector<2x128xf32>
    %63 = math.exp %62 : vector<2x128xf32>
    %cst_20 = arith.constant 1.000000e+00 : f32
    %64 = vector.broadcast %cst_20 : f32 to vector<2x128xf32>
    %65 = arith.addf %64, %63 : vector<2x128xf32>
    %66 = arith.divf %64, %65 : vector<2x128xf32>
    %67 = math.tanh %61 : vector<2x128xf32>
    %68 = vector.extract_strided_slice %66 {offsets = [0, 0], sizes = [2, 32], strides = [1, 1]} : vector<2x128xf32> to vector<2x32xf32>
    %69 = vector.extract_strided_slice %66 {offsets = [0, 32], sizes = [2, 32], strides = [1, 1]} : vector<2x128xf32> to vector<2x32xf32>
    %70 = vector.extract_strided_slice %67 {offsets = [0, 64], sizes = [2, 32], strides = [1, 1]} : vector<2x128xf32> to vector<2x32xf32>
    %71 = vector.extract_strided_slice %66 {offsets = [0, 96], sizes = [2, 32], strides = [1, 1]} : vector<2x128xf32> to vector<2x32xf32>
    %72 = arith.mulf %69, %55 : vector<2x32xf32>
    %73 = arith.mulf %68, %70 : vector<2x32xf32>
    %74 = arith.addf %72, %73 : vector<2x32xf32>
    %75 = math.tanh %74 : vector<2x32xf32>
    %76 = arith.mulf %71, %75 : vector<2x32xf32>
    %77 = vector.extract_strided_slice %37 {offsets = [4, 0], sizes = [2, 128], strides = [1, 1]} : vector<14x128xf32> to vector<2x128xf32>
    %78 = arith.truncf %76 : vector<2x32xf32> to vector<2x32xbf16>
    %cst_21 = arith.constant dense<0.000000e+00> : vector<2x128xf32>
    %79 = tpu.matmul %78, %38, %cst_21 {dimension_numbers = #tpu.dot_dimension_numbers<[1], [0], [0], [1], [0, 0, 1, 1], [], []>} : vector<2x32xbf16>, vector<32x128xbf16>, vector<2x128xf32> -> vector<2x128xf32>
    %80 = arith.addf %77, %79 : vector<2x128xf32>
    %81 = arith.negf %80 : vector<2x128xf32>
    %82 = math.exp %81 : vector<2x128xf32>
    %cst_22 = arith.constant 1.000000e+00 : f32
    %83 = vector.broadcast %cst_22 : f32 to vector<2x128xf32>
    %84 = arith.addf %83, %82 : vector<2x128xf32>
    %85 = arith.divf %83, %84 : vector<2x128xf32>
    %86 = math.tanh %80 : vector<2x128xf32>
    %87 = vector.extract_strided_slice %85 {offsets = [0, 0], sizes = [2, 32], strides = [1, 1]} : vector<2x128xf32> to vector<2x32xf32>
    %88 = vector.extract_strided_slice %85 {offsets = [0, 32], sizes = [2, 32], strides = [1, 1]} : vector<2x128xf32> to vector<2x32xf32>
    %89 = vector.extract_strided_slice %86 {offsets = [0, 64], sizes = [2, 32], strides = [1, 1]} : vector<2x128xf32> to vector<2x32xf32>
    %90 = vector.extract_strided_slice %85 {offsets = [0, 96], sizes = [2, 32], strides = [1, 1]} : vector<2x128xf32> to vector<2x32xf32>
    %91 = arith.mulf %88, %74 : vector<2x32xf32>
    %92 = arith.mulf %87, %89 : vector<2x32xf32>
    %93 = arith.addf %91, %92 : vector<2x32xf32>
    %94 = math.tanh %93 : vector<2x32xf32>
    %95 = arith.mulf %90, %94 : vector<2x32xf32>
    %96 = vector.extract_strided_slice %37 {offsets = [6, 0], sizes = [2, 128], strides = [1, 1]} : vector<14x128xf32> to vector<2x128xf32>
    %97 = arith.truncf %95 : vector<2x32xf32> to vector<2x32xbf16>
    %cst_23 = arith.constant dense<0.000000e+00> : vector<2x128xf32>
    %98 = tpu.matmul %97, %38, %cst_23 {dimension_numbers = #tpu.dot_dimension_numbers<[1], [0], [0], [1], [0, 0, 1, 1], [], []>} : vector<2x32xbf16>, vector<32x128xbf16>, vector<2x128xf32> -> vector<2x128xf32>
    %99 = arith.addf %96, %98 : vector<2x128xf32>
    %100 = arith.negf %99 : vector<2x128xf32>
    %101 = math.exp %100 : vector<2x128xf32>
    %cst_24 = arith.constant 1.000000e+00 : f32
    %102 = vector.broadcast %cst_24 : f32 to vector<2x128xf32>
    %103 = arith.addf %102, %101 : vector<2x128xf32>
    %104 = arith.divf %102, %103 : vector<2x128xf32>
    %105 = math.tanh %99 : vector<2x128xf32>
    %106 = vector.extract_strided_slice %104 {offsets = [0, 0], sizes = [2, 32], strides = [1, 1]} : vector<2x128xf32> to vector<2x32xf32>
    %107 = vector.extract_strided_slice %104 {offsets = [0, 32], sizes = [2, 32], strides = [1, 1]} : vector<2x128xf32> to vector<2x32xf32>
    %108 = vector.extract_strided_slice %105 {offsets = [0, 64], sizes = [2, 32], strides = [1, 1]} : vector<2x128xf32> to vector<2x32xf32>
    %109 = vector.extract_strided_slice %104 {offsets = [0, 96], sizes = [2, 32], strides = [1, 1]} : vector<2x128xf32> to vector<2x32xf32>
    %110 = arith.mulf %107, %93 : vector<2x32xf32>
    %111 = arith.mulf %106, %108 : vector<2x32xf32>
    %112 = arith.addf %110, %111 : vector<2x32xf32>
    %113 = math.tanh %112 : vector<2x32xf32>
    %114 = arith.mulf %109, %113 : vector<2x32xf32>
    %115 = vector.extract_strided_slice %37 {offsets = [8, 0], sizes = [2, 128], strides = [1, 1]} : vector<14x128xf32> to vector<2x128xf32>
    %116 = arith.truncf %114 : vector<2x32xf32> to vector<2x32xbf16>
    %cst_25 = arith.constant dense<0.000000e+00> : vector<2x128xf32>
    %117 = tpu.matmul %116, %38, %cst_25 {dimension_numbers = #tpu.dot_dimension_numbers<[1], [0], [0], [1], [0, 0, 1, 1], [], []>} : vector<2x32xbf16>, vector<32x128xbf16>, vector<2x128xf32> -> vector<2x128xf32>
    %118 = arith.addf %115, %117 : vector<2x128xf32>
    %119 = arith.negf %118 : vector<2x128xf32>
    %120 = math.exp %119 : vector<2x128xf32>
    %cst_26 = arith.constant 1.000000e+00 : f32
    %121 = vector.broadcast %cst_26 : f32 to vector<2x128xf32>
    %122 = arith.addf %121, %120 : vector<2x128xf32>
    %123 = arith.divf %121, %122 : vector<2x128xf32>
    %124 = math.tanh %118 : vector<2x128xf32>
    %125 = vector.extract_strided_slice %123 {offsets = [0, 0], sizes = [2, 32], strides = [1, 1]} : vector<2x128xf32> to vector<2x32xf32>
    %126 = vector.extract_strided_slice %123 {offsets = [0, 32], sizes = [2, 32], strides = [1, 1]} : vector<2x128xf32> to vector<2x32xf32>
    %127 = vector.extract_strided_slice %124 {offsets = [0, 64], sizes = [2, 32], strides = [1, 1]} : vector<2x128xf32> to vector<2x32xf32>
    %128 = vector.extract_strided_slice %123 {offsets = [0, 96], sizes = [2, 32], strides = [1, 1]} : vector<2x128xf32> to vector<2x32xf32>
    %129 = arith.mulf %126, %112 : vector<2x32xf32>
    %130 = arith.mulf %125, %127 : vector<2x32xf32>
    %131 = arith.addf %129, %130 : vector<2x32xf32>
    %132 = math.tanh %131 : vector<2x32xf32>
    %133 = arith.mulf %128, %132 : vector<2x32xf32>
    %134 = vector.extract_strided_slice %37 {offsets = [10, 0], sizes = [2, 128], strides = [1, 1]} : vector<14x128xf32> to vector<2x128xf32>
    %135 = arith.truncf %133 : vector<2x32xf32> to vector<2x32xbf16>
    %cst_27 = arith.constant dense<0.000000e+00> : vector<2x128xf32>
    %136 = tpu.matmul %135, %38, %cst_27 {dimension_numbers = #tpu.dot_dimension_numbers<[1], [0], [0], [1], [0, 0, 1, 1], [], []>} : vector<2x32xbf16>, vector<32x128xbf16>, vector<2x128xf32> -> vector<2x128xf32>
    %137 = arith.addf %134, %136 : vector<2x128xf32>
    %138 = arith.negf %137 : vector<2x128xf32>
    %139 = math.exp %138 : vector<2x128xf32>
    %cst_28 = arith.constant 1.000000e+00 : f32
    %140 = vector.broadcast %cst_28 : f32 to vector<2x128xf32>
    %141 = arith.addf %140, %139 : vector<2x128xf32>
    %142 = arith.divf %140, %141 : vector<2x128xf32>
    %143 = math.tanh %137 : vector<2x128xf32>
    %144 = vector.extract_strided_slice %142 {offsets = [0, 0], sizes = [2, 32], strides = [1, 1]} : vector<2x128xf32> to vector<2x32xf32>
    %145 = vector.extract_strided_slice %142 {offsets = [0, 32], sizes = [2, 32], strides = [1, 1]} : vector<2x128xf32> to vector<2x32xf32>
    %146 = vector.extract_strided_slice %143 {offsets = [0, 64], sizes = [2, 32], strides = [1, 1]} : vector<2x128xf32> to vector<2x32xf32>
    %147 = vector.extract_strided_slice %142 {offsets = [0, 96], sizes = [2, 32], strides = [1, 1]} : vector<2x128xf32> to vector<2x32xf32>
    %148 = arith.mulf %145, %131 : vector<2x32xf32>
    %149 = arith.mulf %144, %146 : vector<2x32xf32>
    %150 = arith.addf %148, %149 : vector<2x32xf32>
    %151 = math.tanh %150 : vector<2x32xf32>
    %152 = arith.mulf %147, %151 : vector<2x32xf32>
    %153 = vector.extract_strided_slice %37 {offsets = [12, 0], sizes = [2, 128], strides = [1, 1]} : vector<14x128xf32> to vector<2x128xf32>
    %154 = arith.truncf %152 : vector<2x32xf32> to vector<2x32xbf16>
    %cst_29 = arith.constant dense<0.000000e+00> : vector<2x128xf32>
    %155 = tpu.matmul %154, %38, %cst_29 {dimension_numbers = #tpu.dot_dimension_numbers<[1], [0], [0], [1], [0, 0, 1, 1], [], []>} : vector<2x32xbf16>, vector<32x128xbf16>, vector<2x128xf32> -> vector<2x128xf32>
    %156 = arith.addf %153, %155 : vector<2x128xf32>
    %157 = arith.negf %156 : vector<2x128xf32>
    %158 = math.exp %157 : vector<2x128xf32>
    %cst_30 = arith.constant 1.000000e+00 : f32
    %159 = vector.broadcast %cst_30 : f32 to vector<2x128xf32>
    %160 = arith.addf %159, %158 : vector<2x128xf32>
    %161 = arith.divf %159, %160 : vector<2x128xf32>
    %162 = math.tanh %156 : vector<2x128xf32>
    %163 = vector.extract_strided_slice %161 {offsets = [0, 0], sizes = [2, 32], strides = [1, 1]} : vector<2x128xf32> to vector<2x32xf32>
    %164 = vector.extract_strided_slice %161 {offsets = [0, 32], sizes = [2, 32], strides = [1, 1]} : vector<2x128xf32> to vector<2x32xf32>
    %165 = vector.extract_strided_slice %162 {offsets = [0, 64], sizes = [2, 32], strides = [1, 1]} : vector<2x128xf32> to vector<2x32xf32>
    %166 = vector.extract_strided_slice %161 {offsets = [0, 96], sizes = [2, 32], strides = [1, 1]} : vector<2x128xf32> to vector<2x32xf32>
    %167 = arith.mulf %164, %150 : vector<2x32xf32>
    %168 = arith.mulf %163, %165 : vector<2x32xf32>
    %169 = arith.addf %167, %168 : vector<2x32xf32>
    %170 = math.tanh %169 : vector<2x32xf32>
    %171 = arith.mulf %166, %170 : vector<2x32xf32>
    %172 = tpu.concatenate %57, %76, %95, %114, %133, %152, %171 in 0 : vector<2x32xf32>, vector<2x32xf32>, vector<2x32xf32>, vector<2x32xf32>, vector<2x32xf32>, vector<2x32xf32>, vector<2x32xf32> -> vector<14x32xf32>
    %cst_31 = arith.constant dense<0.000000e+00> : vector<14x128xf32>
    %173 = tpu.matmul %172, %24, %cst_31 {dimension_numbers = #tpu.dot_dimension_numbers<[1], [0], [0], [1], [0, 0, 1, 1], [], []>} : vector<14x32xf32>, vector<32x128xf32>, vector<14x128xf32> -> vector<14x128xf32>
    %174 = vector.broadcast %26 : vector<1x128xf32> to vector<14x128xf32>
    %175 = arith.addf %173, %174 : vector<14x128xf32>
    %c0_32 = arith.constant 0 : index
    %c0_33 = arith.constant 0 : index
    %176 = vector.load %arg5[%c0_32, %c0_33] : memref<14x128xf32, #tpu.memory_space<vmem>>, vector<14x128xf32>
    tpu.vector_store %arg5[%c0_32, %c0_33], %175 {strides = array<i32>} : memref<14x128xf32, #tpu.memory_space<vmem>>, vector<14x128xf32>,
    %cst_34 = arith.constant dense<0xFF800000> : vector<14xf32>
    %177 = vector.multi_reduction <maximumf>, %175, %cst_34 [1] : vector<14x128xf32> to vector<14xf32>
    %178 = vector.shape_cast %177 : vector<14xf32> to vector<14x1xf32>
    %179 = vector.broadcast %178 : vector<14x1xf32> to vector<14x128xf32>
    %180 = arith.subf %175, %179 : vector<14x128xf32>
    %181 = math.exp %180 : vector<14x128xf32>
    %cst_35 = arith.constant dense<0.000000e+00> : vector<14xf32>
    %182 = vector.multi_reduction <add>, %181, %cst_35 [1] : vector<14x128xf32> to vector<14xf32>
    %183 = vector.shape_cast %182 : vector<14xf32> to vector<14x1xf32>
    %184 = math.log %183 : vector<14x1xf32>
    %185 = arith.addf %178, %184 : vector<14x1xf32>
    %186 = tpu.iota {dimensions = array<i32: 1>} : vector<14x128xi32>
    %187 = vector.broadcast %29 : vector<14x1xi32> to vector<14x128xi32>
    %188 = arith.cmpi eq, %187, %186 : vector<14x128xi32>
    %189 = arith.extui %188 : vector<14x128xi1> to vector<14x128xi32>
    %190 = arith.sitofp %189 : vector<14x128xi32> to vector<14x128xf32>
    %191 = arith.mulf %190, %175 : vector<14x128xf32>
    %cst_36 = arith.constant dense<0.000000e+00> : vector<14xf32>
    %192 = vector.multi_reduction <add>, %191, %cst_36 [1] : vector<14x128xf32> to vector<14xf32>
    %193 = vector.shape_cast %192 : vector<14xf32> to vector<14x1xf32>
    %c0_i32 = arith.constant 0 : i32
    %194 = vector.broadcast %c0_i32 : i32 to vector<14x1xi32>
    %195 = arith.cmpi ne, %29, %194 : vector<14x1xi32>
    %196 = arith.extui %195 : vector<14x1xi1> to vector<14x1xi32>
    %197 = arith.sitofp %196 : vector<14x1xi32> to vector<14x1xf32>
    %198 = arith.subf %185, %193 : vector<14x1xf32>
    %199 = arith.mulf %197, %198 : vector<14x1xf32>
    %200 = vector.shape_cast %199 : vector<14x1xf32> to vector<1x14x1xf32>
    %cst_37 = arith.constant dense<0.000000e+00> : vector<1xf32>
    %201 = vector.multi_reduction <add>, %200, %cst_37 [1, 2] : vector<1x14x1xf32> to vector<1xf32>
    %202 = vector.shape_cast %201 : vector<1xf32> to vector<1x1x1xf32>
    %203 = vector.extract %202[0, 0, 0] : f32 from vector<1x1x1xf32>
    %204 = vector.shape_cast %197 : vector<14x1xf32> to vector<1x14x1xf32>
    %cst_38 = arith.constant dense<0.000000e+00> : vector<1xf32>
    %205 = vector.multi_reduction <add>, %204, %cst_38 [1, 2] : vector<1x14x1xf32> to vector<1xf32>
    %206 = vector.shape_cast %205 : vector<1xf32> to vector<1x1x1xf32>
    %207 = vector.extract %206[0, 0, 0] : f32 from vector<1x1x1xf32>
    %cst_39 = arith.constant 1.000000e+00 : f32
    %208 = arith.maximumf %207, %cst_39 : f32
    %209 = arith.divf %203, %208 : f32
    %c0_40 = arith.constant 0 : index
    %c0_41 = arith.constant 0 : index
    %210 = memref.load %arg6[%c0_40, %c0_41] : memref<1x1xf32, #tpu.memory_space<smem>>
    memref.store %209, %arg6[%c0_40, %c0_41] : memref<1x1xf32, #tpu.memory_space<smem>>
    return
  }
}

</mosaic_0001>

<llo_original>
// kernel: show_and_tell_forward.1
$region0: #{show_and_tell_forward.1}
  #allocation0 [shape = 'u32[]', space=smem, size = 0x4, offset = 0x4, fixed_abs, tag = 'smem constant byte address 0x4 - core index']
  #allocation1 [shape = 'u32[144,128]{1,0:T(1,128)}', space=vmem, size = 0x12000, scoped, tag = 'internal scratch']
  %s0 = inlined_call_operand.vmem [shape: f32[32,48], index: 0, kind: input, shape index: {}]
  %s1 = inlined_call_operand.vmem [shape: f32[49,32], index: 1, kind: input, shape index: {}]
  %s2 = inlined_call_operand.vmem [shape: s32[14,2], index: 2, kind: input, shape index: {}]
  %s3 = inlined_call_operand.vmem [shape: f32[128,128], index: 3, kind: input, shape index: {}]
  %s4 = inlined_call_operand.vmem [shape: f32[2,128], index: 4, kind: input, shape index: {}]
  %s5 = inlined_call_operand.vmem [shape: f32[14,128], index: 5, kind: output, shape index: {0}]
  %s6 = inlined_call_operand.hbm [shape: f32[1,1], index: 6, kind: output, shape index: {1}]
  %7 = xla_tuple %s5, %s6
  %s8 = sld [smem:[#allocation0]]
  $region38: #{show_and_tell_forward.1} parent=0
    _
  %s10 = ssub.s32 1, %s8
  %s11 = scalar_select 0, %s10, %s8
  $region1: #{show_and_tell_forward.1} parent=0
    #allocation2 [shape = 'u8[512]{0}', space=smem, size = 0x200, scoped, tag = 'output window, operand 1, single buffered']
    #allocation3 [shape = 's32[1]{0}', space=sflag, size = 0x4, scoped, tag = 'scoped memory for show_and_tell_forward.1']
    %12 = vsyncpa [#allocation3], 0
    // Predicated region
    $region2: #{show_and_tell_forward.1} parent=1 // pred_check
      _
    $region3: #{show_and_tell_forward.1} parent=1 // pred_check_branch
      %14 = sbr.rel (0) target = $region5
    $region4: #{show_and_tell_forward.1} parent=1 // pred_region
      _
    $region5: #{show_and_tell_forward.1} parent=1 // pred_fallthru
      _
    // Predicated region
    $region6: #{show_and_tell_forward.1} parent=1 // pred_check
      _
    $region7: #{show_and_tell_forward.1} parent=1 // pred_check_branch
      %16 = sbr.rel (0) target = $region9
    $region8: #{show_and_tell_forward.1} parent=1 // pred_region
      _
    $region9: #{show_and_tell_forward.1} parent=1 // pred_fallthru
      _
    // Predicated region
    $region10: #{show_and_tell_forward.1} parent=1 // pred_check
      _
    $region11: #{show_and_tell_forward.1} parent=1 // pred_check_branch
      %18 = sbr.rel (0) target = $region13
    $region12: #{show_and_tell_forward.1} parent=1 // pred_region
      _
    $region13: #{show_and_tell_forward.1} parent=1 // pred_fallthru
      _
    // Predicated region
    $region14: #{show_and_tell_forward.1} parent=1 // pred_check
      _
    $region15: #{show_and_tell_forward.1} parent=1 // pred_check_branch
      %20 = sbr.rel (0) target = $region17
    $region16: #{show_and_tell_forward.1} parent=1 // pred_region
      _
    $region17: #{show_and_tell_forward.1} parent=1 // pred_fallthru
      _
    // Predicated region
    $region18: #{show_and_tell_forward.1} parent=1 // pred_check
      _
    $region19: #{show_and_tell_forward.1} parent=1 // pred_check_branch
      %22 = sbr.rel (0) target = $region21
    $region20: #{show_and_tell_forward.1} parent=1 // pred_region
      _
    $region21: #{show_and_tell_forward.1} parent=1 // pred_fallthru
      _
    %v24 = vld [vmem:[%s1] sm:$0xff]
    %v25 = vld [vmem:[%s1 + $0x8] sm:$0xff]
    %v26 = vld [vmem:[%s1 + $0x10] sm:$0xff]
    %v27 = vld [vmem:[%s1 + $0x18] sm:$0xff]
    %v28 = vld [vmem:[%s1 + $0x20] sm:$0xff]
    %v29 = vld [vmem:[%s1 + $0x28] sm:$0xff]
    %v30 = vld [vmem:[%s1 + $0x30] sm:$0x1]
    %v31 = vld [vmem:[%s0] sm:$0xff]
    %v32 = vld [vmem:[%s0 + $0x8] sm:$0xff]
    %v33 = vld [vmem:[%s0 + $0x10] sm:$0xff]
    %v34 = vld [vmem:[%s0 + $0x18] sm:$0xff]
    %v35 = vlaneseq
    %v36 = vshrl.u32 %v35, 7
    %v37 = vsub.s32 0, %v36
    %v38 = vrot.slane %v30, %v37
    %vm39 = vcmask 392192
    %v41 = vsel %vm39, %v31, 0
    %v44 = vsel %vm39, %v32, 0
    %v47 = vsel %vm39, %v33, 0
    %v50 = vsel %vm39, %v34, 0
    %52 = vmatprep.subr.mxu0 0.0
    %53 = vmatpush1.msra.mxu0 %v24
    %54 = vmatprep.subr.mxu0 0.0
    %55 = vmatpush1.msra.mxu0 %v25
    %56 = vmatprep.subr.mxu0 0.0
    %57 = vmatpush1.msra.mxu0 %v26
    %58 = vmatprep.subr.mxu0 0.0
    %59 = vmatpush1.msra.mxu0 %v27
    %60 = vmatprep.subr.mxu0 0.0
    %61 = vmatpush1.msra.mxu0 %v28
    %62 = vmatprep.subr.mxu0 0.0
    %63 = vmatpush1.msra.mxu0 %v29
    %64 = vmatprep.subr.mxu0 0.0
    %65 = vmatpush1.msra.mxu0 0.0
    %66 = vmatprep.subr.mxu0 0.0
    %67 = vmatpush1.msra.mxu0 0.0
    %68 = vmatprep.subr.mxu0 0.0
    %69 = vmatpush1.msra.mxu0 0.0
    %70 = vmatprep.subr.mxu0 0.0
    %71 = vmatpush1.msra.mxu0 0.0
    %72 = vmatprep.subr.mxu0 0.0
    %73 = vmatpush1.msra.mxu0 0.0
    %74 = vmatprep.subr.mxu0 0.0
    %75 = vmatpush1.msra.mxu0 0.0
    %76 = vmatprep.subr.mxu0 0.0
    %77 = vmatpush1.msra.mxu0 0.0
    %78 = vmatprep.subr.mxu0 0.0
    %79 = vmatpush1.msra.mxu0 0.0
    %80 = vmatprep.subr.mxu0 0.0
    %81 = vmatpush1.msra.mxu0 0.0
    %82 = vmatprep.subr.mxu0 0.0
    %83 = vmatpush1.msra.mxu0 0.0
    %84 = vmatprep.subr.mxu0 0.0
    %85 = vmatpush1.msra.mxu0 0.0
    %86 = vmatprep.subr.mxu0 0.0
    %87 = vmatpush1.msra.mxu0 0.0
    %88 = vmatprep.subr.mxu0 0.0
    %89 = vmatpush1.msra.mxu0 0.0
    %90 = vmatprep.subr.mxu0 0.0
    %91 = vmatpush1.msra.mxu0 0.0
    %92 = vmatprep.subr.mxu0 0.0
    %93 = vmatpush1.msra.mxu0 0.0
    %94 = vmatprep.subr.mxu0 0.0
    %95 = vmatpush1.msra.mxu0 0.0
    %96 = vmatprep.subr.mxu0 0.0
    %97 = vmatpush1.msra.mxu0 0.0
    %98 = vmatprep.subr.mxu0 0.0
    %99 = vmatpush1.msra.mxu0 0.0
    %100 = vmatprep.subr.mxu0 0.0
    %101 = vmatpush1.msra.mxu0 0.0
    %102 = vmatprep.subr.mxu0 0.0
    %103 = vmatpush1.msra.mxu0 0.0
    %104 = vmatprep.subr.mxu0 0.0
    %105 = vmatpush1.msra.mxu0 0.0
    %106 = vmatprep.subr.mxu0 0.0
    %107 = vmatpush1.msra.mxu0 0.0
    %108 = vmatprep.subr.mxu0 0.0
    %109 = vmatpush1.msra.mxu0 0.0
    %110 = vmatprep.subr.mxu0 0.0
    %111 = vmatpush1.msra.mxu0 0.0
    %112 = vmatprep.subr.mxu0 0.0
    %113 = vmatpush1.msra.mxu0 0.0
    %114 = vmatprep.subr.mxu0 0.0
    %115 = vmatpush1.msra.mxu0 0.0
    %116 = vmatprep.mubr.f32.mxu0 0.0
    %117 = vmatmul.mubr.f32.gmra.mrb[0].mxu0 %v41
    %v118 = vpop.f32.mrb[0].mxu0
    %v119 = vadd.f32 %v38, %v118
    %v120 = vpop.f32.mrb[0].mxu0
    %121 = vmatprep.mubr.f32.mxu0 0.0
    %122 = vmatmul.mubr.f32.gmra.mrb[0].mxu0 %v44
    %v123 = vpop.f32.mrb[0].mxu0
    %v124 = vadd.f32 %v38, %v123
    %v125 = vpop.f32.mrb[0].mxu0
    %126 = vmatprep.mubr.f32.mxu0 0.0
    %127 = vmatmul.mubr.f32.gmra.mrb[0].mxu0 %v47
    %v128 = vpop.f32.mrb[0].mxu0
    %v129 = vadd.f32 %v38, %v128
    %v130 = vpop.f32.mrb[0].mxu0
    %131 = vmatprep.mubr.f32.mxu0 0.0
    %132 = vmatmul.mubr.f32.gmra.mrb[0].mxu0 %v50
    %v133 = vpop.f32.mrb[0].mxu0
    %v134 = vadd.f32 %v38, %v133
    %v135 = vpop.f32.mrb[0].mxu0
    %136 = vdwg.mxu0
    %v137 = vlaneseq
    %v138 = vshrl.u32 %v137, 7
    %v139 = vlaneseq
    %v140 = vand.u32 %v139, 127
    %v141 = vmul.u32 %v138, 16
    %vm142 = vcmp.ge.s32.totalorder %v140, %v141
    %v143 = vadd.s32 %v138, 1
    %v144 = vmul.u32 %v143, 16
    %vm145 = vcmp.lt.s32.totalorder %v140, %v144
    %vm146 = vmand %vm142, %vm145
    %v147 = vsel %vm146, 1, 0
    %v148 = vcvt.s32.f32 %v147
    %v149 = vmul.f32 %v148, 0.0625
    %vm150 = vcmask 261120
    %v152 = vsel %vm150, %v149, 0
    %154 = vmatprep.subr.mxu0 0.0
    %155 = vmatpush1.msra.mxu0 %v119
    %156 = vmatprep.subr.mxu0 0.0
    %157 = vmatpush1.msra.mxu0 %v124
    %158 = vmatprep.subr.mxu0 0.0
    %159 = vmatpush1.msra.mxu0 %v129
    %160 = vmatprep.subr.mxu0 0.0
    %161 = vmatpush1.msra.mxu0 %v134
    %162 = vmatprep.subr.mxu0 0.0
    %163 = vmatpush1.msra.mxu0 0.0
    %164 = vmatprep.subr.mxu0 0.0
    %165 = vmatpush1.msra.mxu0 0.0
    %166 = vmatprep.subr.mxu0 0.0
    %167 = vmatpush1.msra.mxu0 0.0
    %168 = vmatprep.subr.mxu0 0.0
    %169 = vmatpush1.msra.mxu0 0.0
    %170 = vmatprep.subr.mxu0 0.0
    %171 = vmatpush1.msra.mxu0 0.0
    %172 = vmatprep.subr.mxu0 0.0
    %173 = vmatpush1.msra.mxu0 0.0
    %174 = vmatprep.subr.mxu0 0.0
    %175 = vmatpush1.msra.mxu0 0.0
    %176 = vmatprep.subr.mxu0 0.0
    %177 = vmatpush1.msra.mxu0 0.0
    %178 = vmatprep.subr.mxu0 0.0
    %179 = vmatpush1.msra.mxu0 0.0
    %180 = vmatprep.subr.mxu0 0.0
    %181 = vmatpush1.msra.mxu0 0.0
    %182 = vmatprep.subr.mxu0 0.0
    %183 = vmatpush1.msra.mxu0 0.0
    %184 = vmatprep.subr.mxu0 0.0
    %185 = vmatpush1.msra.mxu0 0.0
    %186 = vmatprep.subr.mxu0 0.0
    %187 = vmatpush1.msra.mxu0 0.0
    %188 = vmatprep.subr.mxu0 0.0
    %189 = vmatpush1.msra.mxu0 0.0
    %190 = vmatprep.subr.mxu0 0.0
    %191 = vmatpush1.msra.mxu0 0.0
    %192 = vmatprep.subr.mxu0 0.0
    %193 = vmatpush1.msra.mxu0 0.0
    %194 = vmatprep.subr.mxu0 0.0
    %195 = vmatpush1.msra.mxu0 0.0
    %196 = vmatprep.subr.mxu0 0.0
    %197 = vmatpush1.msra.mxu0 0.0
    %198 = vmatprep.subr.mxu0 0.0
    %199 = vmatpush1.msra.mxu0 0.0
    %200 = vmatprep.subr.mxu0 0.0
    %201 = vmatpush1.msra.mxu0 0.0
    %202 = vmatprep.subr.mxu0 0.0
    %203 = vmatpush1.msra.mxu0 0.0
    %204 = vmatprep.subr.mxu0 0.0
    %205 = vmatpush1.msra.mxu0 0.0
    %206 = vmatprep.subr.mxu0 0.0
    %207 = vmatpush1.msra.mxu0 0.0
    %208 = vmatprep.subr.mxu0 0.0
    %209 = vmatpush1.msra.mxu0 0.0
    %210 = vmatprep.subr.mxu0 0.0
    %211 = vmatpush1.msra.mxu0 0.0
    %212 = vmatprep.subr.mxu0 0.0
    %213 = vmatpush1.msra.mxu0 0.0
    %214 = vmatprep.subr.mxu0 0.0
    %215 = vmatpush1.msra.mxu0 0.0
    %216 = vmatprep.subr.mxu0 0.0
    %217 = vmatpush1.msra.mxu0 0.0
    %218 = vmatprep.mubr.f32.mxu0 0.0
    %219 = vmatmul.mubr.f32.gmra.mrb[0].mxu0 %v152
    %v220 = vpop.f32.mrb[0].mxu0
    %v221 = vadd.f32 0.0, %v220
    %v222 = vpop.f32.mrb[0].mxu0
    %223 = vdwg.mxu0
    %v224 = vld [vmem:[%s3] sm:$0xff]
    %v225 = vld [vmem:[%s3 + $0x8] sm:$0xff]
    %v226 = vld [vmem:[%s3 + $0x10] sm:$0xff]
    %v227 = vld [vmem:[%s3 + $0x18] sm:$0xff]
    %v228 = vld [vmem:[%s3 + $0x20] sm:$0xff]
    %v229 = vld [vmem:[%s3 + $0x28] sm:$0xff]
    %v230 = vld [vmem:[%s3 + $0x30] sm:$0xff]
    %v231 = vld [vmem:[%s3 + $0x38] sm:$0xff]
    %v232 = vld [vmem:[%s3 + $0x40] sm:$0xff]
    %v233 = vld [vmem:[%s3 + $0x48] sm:$0xff]
    %v234 = vld [vmem:[%s3 + $0x50] sm:$0xff]
    %v235 = vld [vmem:[%s3 + $0x58] sm:$0xff]
    %v236 = vld [vmem:[%s3 + $0x60] sm:$0xff]
    %v237 = vld [vmem:[%s3 + $0x68] sm:$0xff]
    %v238 = vld [vmem:[%s3 + $0x70] sm:$0xff]
    %v239 = vld [vmem:[%s3 + $0x78] sm:$0xff]
    %v240 = vld [vmem:[%s4] sm:$0x1]
    %v241 = vld [vmem:[%s4 + $0x1] sm:$0x1]
    %v242 = vld [vmem:[%s2] sm:$0xff]
    %v243 = vld [vmem:[%s2 + $0x8] sm:$0x3f]
    %244 = vset.pattern.permute.xlu0 0
    %245 = vperm.xlu0 %244, %v242
    %v246 = vpop.permute.xlu0 %245
    %247 = vset.pattern.permute.xlu0 0
    %248 = vperm.xlu0 %247, %v243
    %v249 = vpop.permute.xlu0 %248
    %vm250 = vcmp.eq.s32.totalorder %v246, %v140
    %vm251 = vcmp.eq.s32.totalorder %v249, %v140
    %v252 = vsel %vm250, 1, 0
    %v253 = vsel %vm251, 1, 0
    %v254 = vcvt.s32.f32 %v252
    %v255 = vcvt.s32.f32 %v253
    %v256 = vlaneseq
    %v257 = vshrl.u32 %v256, 7
    %v258 = vsub.s32 0, %v257
    %v259 = vrot.slane %v240, %v258
    %vm260 = vcmask 523264
    %v262 = vsel %vm260, %v254, 0
    %v265 = vsel %vm260, %v255, 0
    %267 = vmatprep.subr.mxu0 0.0
    %268 = vmatpush1.msra.mxu0 %v224
    %269 = vmatprep.subr.mxu0 0.0
    %270 = vmatpush1.msra.mxu0 %v225
    %271 = vmatprep.subr.mxu0 0.0
    %272 = vmatpush1.msra.mxu0 %v226
    %273 = vmatprep.subr.mxu0 0.0
    %274 = vmatpush1.msra.mxu0 %v227
    %275 = vmatprep.subr.mxu0 0.0
    %276 = vmatpush1.msra.mxu0 %v228
    %277 = vmatprep.subr.mxu0 0.0
    %278 = vmatpush1.msra.mxu0 %v229
    %279 = vmatprep.subr.mxu0 0.0
    %280 = vmatpush1.msra.mxu0 %v230
    %281 = vmatprep.subr.mxu0 0.0
    %282 = vmatpush1.msra.mxu0 %v231
    %283 = vmatprep.subr.mxu0 0.0
    %284 = vmatpush1.msra.mxu0 0.0
    %285 = vmatprep.subr.mxu0 0.0
    %286 = vmatpush1.msra.mxu0 0.0
    %287 = vmatprep.subr.mxu0 0.0
    %288 = vmatpush1.msra.mxu0 0.0
    %289 = vmatprep.subr.mxu0 0.0
    %290 = vmatpush1.msra.mxu0 0.0
    %291 = vmatprep.subr.mxu0 0.0
    %292 = vmatpush1.msra.mxu0 0.0
    %293 = vmatprep.subr.mxu0 0.0
    %294 = vmatpush1.msra.mxu0 0.0
    %295 = vmatprep.subr.mxu0 0.0
    %296 = vmatpush1.msra.mxu0 0.0
    %297 = vmatprep.subr.mxu0 0.0
    %298 = vmatpush1.msra.mxu0 0.0
    %299 = vmatprep.subr.mxu0 0.0
    %300 = vmatpush1.msra.mxu0 0.0
    %301 = vmatprep.subr.mxu0 0.0
    %302 = vmatpush1.msra.mxu0 0.0
    %303 = vmatprep.subr.mxu0 0.0
    %304 = vmatpush1.msra.mxu0 0.0
    %305 = vmatprep.subr.mxu0 0.0
    %306 = vmatpush1.msra.mxu0 0.0
    %307 = vmatprep.subr.mxu0 0.0
    %308 = vmatpush1.msra.mxu0 0.0
    %309 = vmatprep.subr.mxu0 0.0
    %310 = vmatpush1.msra.mxu0 0.0
    %311 = vmatprep.subr.mxu0 0.0
    %312 = vmatpush1.msra.mxu0 0.0
    %313 = vmatprep.subr.mxu0 0.0
    %314 = vmatpush1.msra.mxu0 0.0
    %315 = vmatprep.subr.mxu0 0.0
    %316 = vmatpush1.msra.mxu0 0.0
    %317 = vmatprep.subr.mxu0 0.0
    %318 = vmatpush1.msra.mxu0 0.0
    %319 = vmatprep.subr.mxu0 0.0
    %320 = vmatpush1.msra.mxu0 0.0
    %321 = vmatprep.subr.mxu0 0.0
    %322 = vmatpush1.msra.mxu0 0.0
    %323 = vmatprep.subr.mxu0 0.0
    %324 = vmatpush1.msra.mxu0 0.0
    %325 = vmatprep.subr.mxu0 0.0
    %326 = vmatpush1.msra.mxu0 0.0
    %327 = vmatprep.subr.mxu0 0.0
    %328 = vmatpush1.msra.mxu0 0.0
    %329 = vmatprep.subr.mxu0 0.0
    %330 = vmatpush1.msra.mxu0 0.0
    %331 = vmatprep.mubr.f32.mxu0 0.0
    %332 = vmatmul.mubr.f32.gmra.mrb[0].mxu0 %v262
    %v333 = vpop.f32.mrb[0].mxu0
    %v334 = vadd.f32 %v259, %v333
    %v335 = vpop.f32.mrb[0].mxu0
    %336 = vmatprep.mubr.f32.mxu0 0.0
    %337 = vmatmul.mubr.f32.gmra.mrb[0].mxu0 %v265
    %v338 = vpop.f32.mrb[0].mxu0
    %v339 = vadd.f32 %v259, %v338
    %v340 = vpop.f32.mrb[0].mxu0
    %341 = vdwg.mxu0
    %v342 = vpack.c.bf16 %v233, %v232
    %v343 = vpack.c.bf16 %v235, %v234
    %v344 = vpack.c.bf16 %v221, %v221
    %v346 = vsel %vm150, %v344, 0
    %348 = vmatprep.subr.bf16.mxu0 0
    %349 = vmatpush1.bf16.msra.mxu0 %v342
    %350 = vmatprep.subr.bf16.mxu0 0
    %351 = vmatpush1.bf16.msra.mxu0 %v343
    %352 = vmatprep.subr.bf16.mxu0 0
    %353 = vmatpush1.bf16.msra.mxu0 0
    %354 = vmatprep.subr.bf16.mxu0 0
    %355 = vmatpush1.bf16.msra.mxu0 0
    %356 = vmatprep.subr.bf16.mxu0 0
    %357 = vmatpush1.bf16.msra.mxu0 0
    %358 = vmatprep.subr.bf16.mxu0 0
    %359 = vmatpush1.bf16.msra.mxu0 0
    %360 = vmatprep.subr.bf16.mxu0 0
    %361 = vmatpush1.bf16.msra.mxu0 0
    %362 = vmatprep.subr.bf16.mxu0 0
    %363 = vmatpush1.bf16.msra.mxu0 0
    %364 = vmatprep.subr.bf16.mxu0 0
    %365 = vmatpush1.bf16.msra.mxu0 0
    %366 = vmatprep.subr.bf16.mxu0 0
    %367 = vmatpush1.bf16.msra.mxu0 0
    %368 = vmatprep.subr.bf16.mxu0 0
    %369 = vmatpush1.bf16.msra.mxu0 0
    %370 = vmatprep.subr.bf16.mxu0 0
    %371 = vmatpush1.bf16.msra.mxu0 0
    %372 = vmatprep.subr.bf16.mxu0 0
    %373 = vmatpush1.bf16.msra.mxu0 0
    %374 = vmatprep.subr.bf16.mxu0 0
    %375 = vmatpush1.bf16.msra.mxu0 0
    %376 = vmatprep.subr.bf16.mxu0 0
    %377 = vmatpush1.bf16.msra.mxu0 0
    %378 = vmatprep.subr.bf16.mxu0 0
    %379 = vmatpush1.bf16.msra.mxu0 0
    %380 = vmatprep.mubr.bf16.mxu0 0
    %381 = vmatmul.mubr.bf16.gmra.mrb[0].mxu0 %v346
    %v382 = vpop.f32.mrb[0].mxu0
    %v383 = vadd.f32 0.0, %v382
    %v384 = vpop.f32.mrb[0].mxu0
    %v385 = vpop.f32.mrb[0].mxu0
    %v386 = vpop.f32.mrb[0].mxu0
    %387 = vdwg.mxu0
    %v388 = vadd.f32 %v334, %v383
    %v389 = vxor.u32 %v388, 2147483648
    %v390 = vmul.f32 %v389, 1.442695
    %v391 = vpow.pop %v390
    %v392 = vadd.f32 %v391, 1.0
    %v393 = vrcp.pop %v392
    %v394 = vmul.f32 1.0, %v393
    %v395 = vtanh.pop %v388
    %397 = vrot.lane.b32.xlu0 %v221, 32
    %v398 = vpop.permute.xlu0 %397
    %v400 = vmul.f32 %v394, %v398
    %402 = vrot.lane.b32.xlu0 %v395, 64
    %v403 = vpop.permute.xlu0 %402
    %v405 = vmul.f32 %v394, %v403
    %407 = vrot.lane.b32.xlu0 %v405, 32
    %v408 = vpop.permute.xlu0 %407
    %v410 = vadd.f32 %v400, %v408
    %v411 = vtanh.pop %v410
    %413 = vrot.lane.b32.xlu0 %v411, 64
    %v414 = vpop.permute.xlu0 %413
    %v416 = vmul.f32 %v394, %v414
    %v417 = vpack.c.bf16 %v416, %v416
    %419 = vrot.lane.b32.xlu0 %v417, 32
    %v420 = vpop.permute.xlu0 %419
    %v422 = vsel %vm150, %v420, 0
    %424 = vmatprep.subr.bf16.mxu0 0
    %425 = vmatpush1.bf16.msra.mxu0 %v342
    %426 = vmatprep.subr.bf16.mxu0 0
    %427 = vmatpush1.bf16.msra.mxu0 %v343
    %428 = vmatprep.subr.bf16.mxu0 0
    %429 = vmatpush1.bf16.msra.mxu0 0
    %430 = vmatprep.subr.bf16.mxu0 0
    %431 = vmatpush1.bf16.msra.mxu0 0
    %432 = vmatprep.subr.bf16.mxu0 0
    %433 = vmatpush1.bf16.msra.mxu0 0
    %434 = vmatprep.subr.bf16.mxu0 0
    %435 = vmatpush1.bf16.msra.mxu0 0
    %436 = vmatprep.subr.bf16.mxu0 0
    %437 = vmatpush1.bf16.msra.mxu0 0
    %438 = vmatprep.subr.bf16.mxu0 0
    %439 = vmatpush1.bf16.msra.mxu0 0
    %440 = vmatprep.subr.bf16.mxu0 0
    %441 = vmatpush1.bf16.msra.mxu0 0
    %442 = vmatprep.subr.bf16.mxu0 0
    %443 = vmatpush1.bf16.msra.mxu0 0
    %444 = vmatprep.subr.bf16.mxu0 0
    %445 = vmatpush1.bf16.msra.mxu0 0
    %446 = vmatprep.subr.bf16.mxu0 0
    %447 = vmatpush1.bf16.msra.mxu0 0
    %448 = vmatprep.subr.bf16.mxu0 0
    %449 = vmatpush1.bf16.msra.mxu0 0
    %450 = vmatprep.subr.bf16.mxu0 0
    %451 = vmatpush1.bf16.msra.mxu0 0
    %452 = vmatprep.subr.bf16.mxu0 0
    %453 = vmatpush1.bf16.msra.mxu0 0
    %454 = vmatprep.subr.bf16.mxu0 0
    %455 = vmatpush1.bf16.msra.mxu0 0
    %456 = vmatprep.mubr.bf16.mxu0 0
    %457 = vmatmul.mubr.bf16.gmra.mrb[0].mxu0 %v422
    %v458 = vpop.f32.mrb[0].mxu0
    %v459 = vadd.f32 0.0, %v458
    %v460 = vpop.f32.mrb[0].mxu0
    %v461 = vpop.f32.mrb[0].mxu0
    %v462 = vpop.f32.mrb[0].mxu0
    %463 = vdwg.mxu0
    %v465 = vrot.slane %v459, 6
    %v467 = vadd.f32 %v334, %v465
    %v468 = vxor.u32 %v467, 2147483648
    %v469 = vmul.f32 %v468, 1.442695
    %v470 = vpow.pop %v469
    %v471 = vadd.f32 %v470, 1.0
    %v472 = vrcp.pop %v471
    %v473 = vmul.f32 1.0, %v472
    %v474 = vtanh.pop %v467
    %v476 = vrot.slane %v410, 6
    %v478 = vmul.f32 %v473, %v476
    %480 = vrot.lane.b32.xlu0 %v474, 64
    %v481 = vpop.permute.xlu0 %480
    %v483 = vmul.f32 %v473, %v481
    %485 = vrot.lane.b32.xlu0 %v483, 32
    %v486 = vpop.permute.xlu0 %485
    %v488 = vadd.f32 %v478, %v486
    %v489 = vtanh.pop %v488
    %491 = vrot.lane.b32.xlu0 %v489, 64
    %v492 = vpop.permute.xlu0 %491
    %v494 = vmul.f32 %v473, %v492
    %v495 = vpack.c.bf16 %v494, %v494
    %v497 = vrot.slane %v495, 1
    %498 = vrot.lane.b32.xlu0 %v497, 32
    %v499 = vpop.permute.xlu0 %498
    %v501 = vsel %vm150, %v499, 0
    %503 = vmatprep.subr.bf16.mxu0 0
    %504 = vmatpush1.bf16.msra.mxu0 %v342
    %505 = vmatprep.subr.bf16.mxu0 0
    %506 = vmatpush1.bf16.msra.mxu0 %v343
    %507 = vmatprep.subr.bf16.mxu0 0
    %508 = vmatpush1.bf16.msra.mxu0 0
    %509 = vmatprep.subr.bf16.mxu0 0
    %510 = vmatpush1.bf16.msra.mxu0 0
    %511 = vmatprep.subr.bf16.mxu0 0
    %512 = vmatpush1.bf16.msra.mxu0 0
    %513 = vmatprep.subr.bf16.mxu0 0
    %514 = vmatpush1.bf16.msra.mxu0 0
    %515 = vmatprep.subr.bf16.mxu0 0
    %516 = vmatpush1.bf16.msra.mxu0 0
    %517 = vmatprep.subr.bf16.mxu0 0
    %518 = vmatpush1.bf16.msra.mxu0 0
    %519 = vmatprep.subr.bf16.mxu0 0
    %520 = vmatpush1.bf16.msra.mxu0 0
    %521 = vmatprep.subr.bf16.mxu0 0
    %522 = vmatpush1.bf16.msra.mxu0 0
    %523 = vmatprep.subr.bf16.mxu0 0
    %524 = vmatpush1.bf16.msra.mxu0 0
    %525 = vmatprep.subr.bf16.mxu0 0
    %526 = vmatpush1.bf16.msra.mxu0 0
    %527 = vmatprep.subr.bf16.mxu0 0
    %528 = vmatpush1.bf16.msra.mxu0 0
    %529 = vmatprep.subr.bf16.mxu0 0
    %530 = vmatpush1.bf16.msra.mxu0 0
    %531 = vmatprep.subr.bf16.mxu0 0
    %532 = vmatpush1.bf16.msra.mxu0 0
    %533 = vmatprep.subr.bf16.mxu0 0
    %534 = vmatpush1.bf16.msra.mxu0 0
    %535 = vmatprep.mubr.bf16.mxu0 0
    %536 = vmatmul.mubr.bf16.gmra.mrb[0].mxu0 %v501
    %v537 = vpop.f32.mrb[0].mxu0
    %v538 = vadd.f32 0.0, %v537
    %v539 = vpop.f32.mrb[0].mxu0
    %v540 = vpop.f32.mrb[0].mxu0
    %v541 = vpop.f32.mrb[0].mxu0
    %542 = vdwg.mxu0
    %v544 = vrot.slane %v538, 4
    %v546 = vadd.f32 %v334, %v544
    %v547 = vxor.u32 %v546, 2147483648
    %v548 = vmul.f32 %v547, 1.442695
    %v549 = vpow.pop %v548
    %v550 = vadd.f32 %v549, 1.0
    %v551 = vrcp.pop %v550
    %v552 = vmul.f32 1.0, %v551
    %v553 = vtanh.pop %v546
    %v555 = vrot.slane %v488, 6
    %v557 = vmul.f32 %v552, %v555
    %559 = vrot.lane.b32.xlu0 %v553, 64
    %v560 = vpop.permute.xlu0 %559
    %v562 = vmul.f32 %v552, %v560
    %564 = vrot.lane.b32.xlu0 %v562, 32
    %v565 = vpop.permute.xlu0 %564
    %v567 = vadd.f32 %v557, %v565
    %v568 = vtanh.pop %v567
    %570 = vrot.lane.b32.xlu0 %v568, 64
    %v571 = vpop.permute.xlu0 %570
    %v573 = vmul.f32 %v552, %v571
    %v574 = vpack.c.bf16 %v573, %v573
    %v576 = vrot.slane %v574, 2
    %577 = vrot.lane.b32.xlu0 %v576, 32
    %v578 = vpop.permute.xlu0 %577
    %v580 = vsel %vm150, %v578, 0
    %582 = vmatprep.subr.bf16.mxu0 0
    %583 = vmatpush1.bf16.msra.mxu0 %v342
    %584 = vmatprep.subr.bf16.mxu0 0
    %585 = vmatpush1.bf16.msra.mxu0 %v343
    %586 = vmatprep.subr.bf16.mxu0 0
    %587 = vmatpush1.bf16.msra.mxu0 0
    %588 = vmatprep.subr.bf16.mxu0 0
    %589 = vmatpush1.bf16.msra.mxu0 0
    %590 = vmatprep.subr.bf16.mxu0 0
    %591 = vmatpush1.bf16.msra.mxu0 0
    %592 = vmatprep.subr.bf16.mxu0 0
    %593 = vmatpush1.bf16.msra.mxu0 0
    %594 = vmatprep.subr.bf16.mxu0 0
    %595 = vmatpush1.bf16.msra.mxu0 0
    %596 = vmatprep.subr.bf16.mxu0 0
    %597 = vmatpush1.bf16.msra.mxu0 0
    %598 = vmatprep.subr.bf16.mxu0 0
    %599 = vmatpush1.bf16.msra.mxu0 0
    %600 = vmatprep.subr.bf16.mxu0 0
    %601 = vmatpush1.bf16.msra.mxu0 0
    %602 = vmatprep.subr.bf16.mxu0 0
    %603 = vmatpush1.bf16.msra.mxu0 0
    %604 = vmatprep.subr.bf16.mxu0 0
    %605 = vmatpush1.bf16.msra.mxu0 0
    %606 = vmatprep.subr.bf16.mxu0 0
    %607 = vmatpush1.bf16.msra.mxu0 0
    %608 = vmatprep.subr.bf16.mxu0 0
    %609 = vmatpush1.bf16.msra.mxu0 0
    %610 = vmatprep.subr.bf16.mxu0 0
    %611 = vmatpush1.bf16.msra.mxu0 0
    %612 = vmatprep.subr.bf16.mxu0 0
    %613 = vmatpush1.bf16.msra.mxu0 0
    %614 = vmatprep.mubr.bf16.mxu0 0
    %615 = vmatmul.mubr.bf16.gmra.mrb[0].mxu0 %v580
    %v616 = vpop.f32.mrb[0].mxu0
    %v617 = vadd.f32 0.0, %v616
    %v618 = vpop.f32.mrb[0].mxu0
    %v619 = vpop.f32.mrb[0].mxu0
    %v620 = vpop.f32.mrb[0].mxu0
    %621 = vdwg.mxu0
    %v623 = vrot.slane %v617, 2
    %v625 = vadd.f32 %v334, %v623
    %v626 = vxor.u32 %v625, 2147483648
    %v627 = vmul.f32 %v626, 1.442695
    %v628 = vpow.pop %v627
    %v629 = vadd.f32 %v628, 1.0
    %v630 = vrcp.pop %v629
    %v631 = vmul.f32 1.0, %v630
    %v632 = vtanh.pop %v625
    %v634 = vrot.slane %v567, 6
    %v636 = vmul.f32 %v631, %v634
    %638 = vrot.lane.b32.xlu0 %v632, 64
    %v639 = vpop.permute.xlu0 %638
    %v641 = vmul.f32 %v631, %v639
    %643 = vrot.lane.b32.xlu0 %v641, 32
    %v644 = vpop.permute.xlu0 %643
    %v646 = vadd.f32 %v636, %v644
    %v647 = vtanh.pop %v646
    %649 = vrot.lane.b32.xlu0 %v647, 64
    %v650 = vpop.permute.xlu0 %649
    %v652 = vmul.f32 %v631, %v650
    %v653 = vpack.c.bf16 %v652, %v652
    %v655 = vrot.slane %v653, 3
    %656 = vrot.lane.b32.xlu0 %v655, 32
    %v657 = vpop.permute.xlu0 %656
    %v659 = vsel %vm150, %v657, 0
    %661 = vmatprep.subr.bf16.mxu0 0
    %662 = vmatpush1.bf16.msra.mxu0 %v342
    %663 = vmatprep.subr.bf16.mxu0 0
    %664 = vmatpush1.bf16.msra.mxu0 %v343
    %665 = vmatprep.subr.bf16.mxu0 0
    %666 = vmatpush1.bf16.msra.mxu0 0
    %667 = vmatprep.subr.bf16.mxu0 0
    %668 = vmatpush1.bf16.msra.mxu0 0
    %669 = vmatprep.subr.bf16.mxu0 0
    %670 = vmatpush1.bf16.msra.mxu0 0
    %671 = vmatprep.subr.bf16.mxu0 0
    %672 = vmatpush1.bf16.msra.mxu0 0
    %673 = vmatprep.subr.bf16.mxu0 0
    %674 = vmatpush1.bf16.msra.mxu0 0
    %675 = vmatprep.subr.bf16.mxu0 0
    %676 = vmatpush1.bf16.msra.mxu0 0
    %677 = vmatprep.subr.bf16.mxu0 0
    %678 = vmatpush1.bf16.msra.mxu0 0
    %679 = vmatprep.subr.bf16.mxu0 0
    %680 = vmatpush1.bf16.msra.mxu0 0
    %681 = vmatprep.subr.bf16.mxu0 0
    %682 = vmatpush1.bf16.msra.mxu0 0
    %683 = vmatprep.subr.bf16.mxu0 0
    %684 = vmatpush1.bf16.msra.mxu0 0
    %685 = vmatprep.subr.bf16.mxu0 0
    %686 = vmatpush1.bf16.msra.mxu0 0
    %687 = vmatprep.subr.bf16.mxu0 0
    %688 = vmatpush1.bf16.msra.mxu0 0
    %689 = vmatprep.subr.bf16.mxu0 0
    %690 = vmatpush1.bf16.msra.mxu0 0
    %691 = vmatprep.subr.bf16.mxu0 0
    %692 = vmatpush1.bf16.msra.mxu0 0
    %693 = vmatprep.mubr.bf16.mxu0 0
    %694 = vmatmul.mubr.bf16.gmra.mrb[0].mxu0 %v659
    %v695 = vpop.f32.mrb[0].mxu0
    %v696 = vadd.f32 0.0, %v695
    %v697 = vpop.f32.mrb[0].mxu0
    %v698 = vpop.f32.mrb[0].mxu0
    %v699 = vpop.f32.mrb[0].mxu0
    %700 = vdwg.mxu0
    %v701 = vadd.f32 %v339, %v696
    %v702 = vxor.u32 %v701, 2147483648
    %v703 = vmul.f32 %v702, 1.442695
    %v704 = vpow.pop %v703
    %v705 = vadd.f32 %v704, 1.0
    %v706 = vrcp.pop %v705
    %v707 = vmul.f32 1.0, %v706
    %v708 = vtanh.pop %v701
    %v710 = vrot.slane %v646, 6
    %v712 = vmul.f32 %v707, %v710
    %714 = vrot.lane.b32.xlu0 %v708, 64
    %v715 = vpop.permute.xlu0 %714
    %v717 = vmul.f32 %v707, %v715
    %719 = vrot.lane.b32.xlu0 %v717, 32
    %v720 = vpop.permute.xlu0 %719
    %v722 = vadd.f32 %v712, %v720
    %v723 = vtanh.pop %v722
    %725 = vrot.lane.b32.xlu0 %v723, 64
    %v726 = vpop.permute.xlu0 %725
    %v728 = vmul.f32 %v707, %v726
    %v729 = vpack.c.bf16 %v728, %v728
    %731 = vrot.lane.b32.xlu0 %v729, 32
    %v732 = vpop.permute.xlu0 %731
    %v734 = vsel %vm150, %v732, 0
    %736 = vmatprep.subr.bf16.mxu0 0
    %737 = vmatpush1.bf16.msra.mxu0 %v342
    %738 = vmatprep.subr.bf16.mxu0 0
    %739 = vmatpush1.bf16.msra.mxu0 %v343
    %740 = vmatprep.subr.bf16.mxu0 0
    %741 = vmatpush1.bf16.msra.mxu0 0
    %742 = vmatprep.subr.bf16.mxu0 0
    %743 = vmatpush1.bf16.msra.mxu0 0
    %744 = vmatprep.subr.bf16.mxu0 0
    %745 = vmatpush1.bf16.msra.mxu0 0
    %746 = vmatprep.subr.bf16.mxu0 0
    %747 = vmatpush1.bf16.msra.mxu0 0
    %748 = vmatprep.subr.bf16.mxu0 0
    %749 = vmatpush1.bf16.msra.mxu0 0
    %750 = vmatprep.subr.bf16.mxu0 0
    %751 = vmatpush1.bf16.msra.mxu0 0
    %752 = vmatprep.subr.bf16.mxu0 0
    %753 = vmatpush1.bf16.msra.mxu0 0
    %754 = vmatprep.subr.bf16.mxu0 0
    %755 = vmatpush1.bf16.msra.mxu0 0
    %756 = vmatprep.subr.bf16.mxu0 0
    %757 = vmatpush1.bf16.msra.mxu0 0
    %758 = vmatprep.subr.bf16.mxu0 0
    %759 = vmatpush1.bf16.msra.mxu0 0
    %760 = vmatprep.subr.bf16.mxu0 0
    %761 = vmatpush1.bf16.msra.mxu0 0
    %762 = vmatprep.subr.bf16.mxu0 0
    %763 = vmatpush1.bf16.msra.mxu0 0
    %764 = vmatprep.subr.bf16.mxu0 0
    %765 = vmatpush1.bf16.msra.mxu0 0
    %766 = vmatprep.subr.bf16.mxu0 0
    %767 = vmatpush1.bf16.msra.mxu0 0
    %768 = vmatprep.mubr.bf16.mxu0 0
    %769 = vmatmul.mubr.bf16.gmra.mrb[0].mxu0 %v734
    %v770 = vpop.f32.mrb[0].mxu0
    %v771 = vadd.f32 0.0, %v770
    %v772 = vpop.f32.mrb[0].mxu0
    %v773 = vpop.f32.mrb[0].mxu0
    %v774 = vpop.f32.mrb[0].mxu0
    %775 = vdwg.mxu0
    %v777 = vrot.slane %v771, 6
    %v779 = vadd.f32 %v339, %v777
    %v780 = vxor.u32 %v779, 2147483648
    %v781 = vmul.f32 %v780, 1.442695
    %v782 = vpow.pop %v781
    %v783 = vadd.f32 %v782, 1.0
    %v784 = vrcp.pop %v783
    %v785 = vmul.f32 1.0, %v784
    %v786 = vtanh.pop %v779
    %v788 = vrot.slane %v722, 6
    %v790 = vmul.f32 %v785, %v788
    %792 = vrot.lane.b32.xlu0 %v786, 64
    %v793 = vpop.permute.xlu0 %792
    %v795 = vmul.f32 %v785, %v793
    %797 = vrot.lane.b32.xlu0 %v795, 32
    %v798 = vpop.permute.xlu0 %797
    %v800 = vadd.f32 %v790, %v798
    %v801 = vtanh.pop %v800
    %803 = vrot.lane.b32.xlu0 %v801, 64
    %v804 = vpop.permute.xlu0 %803
    %v806 = vmul.f32 %v785, %v804
    %v807 = vpack.c.bf16 %v806, %v806
    %v809 = vrot.slane %v807, 1
    %810 = vrot.lane.b32.xlu0 %v809, 32
    %v811 = vpop.permute.xlu0 %810
    %v813 = vsel %vm150, %v811, 0
    %815 = vmatprep.subr.bf16.mxu0 0
    %816 = vmatpush1.bf16.msra.mxu0 %v342
    %817 = vmatprep.subr.bf16.mxu0 0
    %818 = vmatpush1.bf16.msra.mxu0 %v343
    %819 = vmatprep.subr.bf16.mxu0 0
    %820 = vmatpush1.bf16.msra.mxu0 0
    %821 = vmatprep.subr.bf16.mxu0 0
    %822 = vmatpush1.bf16.msra.mxu0 0
    %823 = vmatprep.subr.bf16.mxu0 0
    %824 = vmatpush1.bf16.msra.mxu0 0
    %825 = vmatprep.subr.bf16.mxu0 0
    %826 = vmatpush1.bf16.msra.mxu0 0
    %827 = vmatprep.subr.bf16.mxu0 0
    %828 = vmatpush1.bf16.msra.mxu0 0
    %829 = vmatprep.subr.bf16.mxu0 0
    %830 = vmatpush1.bf16.msra.mxu0 0
    %831 = vmatprep.subr.bf16.mxu0 0
    %832 = vmatpush1.bf16.msra.mxu0 0
    %833 = vmatprep.subr.bf16.mxu0 0
    %834 = vmatpush1.bf16.msra.mxu0 0
    %835 = vmatprep.subr.bf16.mxu0 0
    %836 = vmatpush1.bf16.msra.mxu0 0
    %837 = vmatprep.subr.bf16.mxu0 0
    %838 = vmatpush1.bf16.msra.mxu0 0
    %839 = vmatprep.subr.bf16.mxu0 0
    %840 = vmatpush1.bf16.msra.mxu0 0
    %841 = vmatprep.subr.bf16.mxu0 0
    %842 = vmatpush1.bf16.msra.mxu0 0
    %843 = vmatprep.subr.bf16.mxu0 0
    %844 = vmatpush1.bf16.msra.mxu0 0
    %845 = vmatprep.subr.bf16.mxu0 0
    %846 = vmatpush1.bf16.msra.mxu0 0
    %847 = vmatprep.mubr.bf16.mxu0 0
    %848 = vmatmul.mubr.bf16.gmra.mrb[0].mxu0 %v813
    %v849 = vpop.f32.mrb[0].mxu0
    %v850 = vadd.f32 0.0, %v849
    %v851 = vpop.f32.mrb[0].mxu0
    %v852 = vpop.f32.mrb[0].mxu0
    %v853 = vpop.f32.mrb[0].mxu0
    %854 = vdwg.mxu0
    %v856 = vrot.slane %v850, 4
    %v858 = vadd.f32 %v339, %v856
    %v859 = vxor.u32 %v858, 2147483648
    %v860 = vmul.f32 %v859, 1.442695
    %v861 = vpow.pop %v860
    %v862 = vadd.f32 %v861, 1.0
    %v863 = vrcp.pop %v862
    %v864 = vmul.f32 1.0, %v863
    %v865 = vtanh.pop %v858
    %v867 = vrot.slane %v800, 6
    %v869 = vmul.f32 %v864, %v867
    %871 = vrot.lane.b32.xlu0 %v865, 64
    %v872 = vpop.permute.xlu0 %871
    %v874 = vmul.f32 %v864, %v872
    %876 = vrot.lane.b32.xlu0 %v874, 32
    %v877 = vpop.permute.xlu0 %876
    %v879 = vadd.f32 %v869, %v877
    %v880 = vtanh.pop %v879
    %882 = vrot.lane.b32.xlu0 %v880, 64
    %v883 = vpop.permute.xlu0 %882
    %v885 = vmul.f32 %v864, %v883
    %vm886 = vcmask 1041408
    %v887 = vsel %vm886, %v416, %v494
    %vm888 = vcmask 1043456
    %v889 = vsel %vm888, %v887, %v573
    %vm890 = vcmask 1045504
    %v891 = vsel %vm890, %v889, %v652
    %v892 = vsel %vm886, %v728, %v806
    %v893 = vsel %vm888, %v892, %v885
    %v894 = vlaneseq
    %v895 = vshrl.u32 %v894, 7
    %v896 = vsub.s32 0, %v895
    %v897 = vrot.slane %v241, %v896
    %900 = vrot.lane.b32.xlu0 %v891, 32
    %v901 = vpop.permute.xlu0 %900
    %902 = vrot.lane.b32.xlu0 %v893, 32
    %v903 = vpop.permute.xlu0 %902
    %v904 = vsel %vm150, %v901, 0
    %v906 = vsel %vm150, %v903, 0
    %908 = vmatprep.subr.mxu0 0.0
    %909 = vmatpush1.msra.mxu0 %v236
    %910 = vmatprep.subr.mxu0 0.0
    %911 = vmatpush1.msra.mxu0 %v237
    %912 = vmatprep.subr.mxu0 0.0
    %913 = vmatpush1.msra.mxu0 %v238
    %914 = vmatprep.subr.mxu0 0.0
    %915 = vmatpush1.msra.mxu0 %v239
    %916 = vmatprep.subr.mxu0 0.0
    %917 = vmatpush1.msra.mxu0 0.0
    %918 = vmatprep.subr.mxu0 0.0
    %919 = vmatpush1.msra.mxu0 0.0
    %920 = vmatprep.subr.mxu0 0.0
    %921 = vmatpush1.msra.mxu0 0.0
    %922 = vmatprep.subr.mxu0 0.0
    %923 = vmatpush1.msra.mxu0 0.0
    %924 = vmatprep.subr.mxu0 0.0
    %925 = vmatpush1.msra.mxu0 0.0
    %926 = vmatprep.subr.mxu0 0.0
    %927 = vmatpush1.msra.mxu0 0.0
    %928 = vmatprep.subr.mxu0 0.0
    %929 = vmatpush1.msra.mxu0 0.0
    %930 = vmatprep.subr.mxu0 0.0
    %931 = vmatpush1.msra.mxu0 0.0
    %932 = vmatprep.subr.mxu0 0.0
    %933 = vmatpush1.msra.mxu0 0.0
    %934 = vmatprep.subr.mxu0 0.0
    %935 = vmatpush1.msra.mxu0 0.0
    %936 = vmatprep.subr.mxu0 0.0
    %937 = vmatpush1.msra.mxu0 0.0
    %938 = vmatprep.subr.mxu0 0.0
    %939 = vmatpush1.msra.mxu0 0.0
    %940 = vmatprep.subr.mxu0 0.0
    %941 = vmatpush1.msra.mxu0 0.0
    %942 = vmatprep.subr.mxu0 0.0
    %943 = vmatpush1.msra.mxu0 0.0
    %944 = vmatprep.subr.mxu0 0.0
    %945 = vmatpush1.msra.mxu0 0.0
    %946 = vmatprep.subr.mxu0 0.0
    %947 = vmatpush1.msra.mxu0 0.0
    %948 = vmatprep.subr.mxu0 0.0
    %949 = vmatpush1.msra.mxu0 0.0
    %950 = vmatprep.subr.mxu0 0.0
    %951 = vmatpush1.msra.mxu0 0.0
    %952 = vmatprep.subr.mxu0 0.0
    %953 = vmatpush1.msra.mxu0 0.0
    %954 = vmatprep.subr.mxu0 0.0
    %955 = vmatpush1.msra.mxu0 0.0
    %956 = vmatprep.subr.mxu0 0.0
    %957 = vmatpush1.msra.mxu0 0.0
    %958 = vmatprep.subr.mxu0 0.0
    %959 = vmatpush1.msra.mxu0 0.0
    %960 = vmatprep.subr.mxu0 0.0
    %961 = vmatpush1.msra.mxu0 0.0
    %962 = vmatprep.subr.mxu0 0.0
    %963 = vmatpush1.msra.mxu0 0.0
    %964 = vmatprep.subr.mxu0 0.0
    %965 = vmatpush1.msra.mxu0 0.0
    %966 = vmatprep.subr.mxu0 0.0
    %967 = vmatpush1.msra.mxu0 0.0
    %968 = vmatprep.subr.mxu0 0.0
    %969 = vmatpush1.msra.mxu0 0.0
    %970 = vmatprep.subr.mxu0 0.0
    %971 = vmatpush1.msra.mxu0 0.0
    %972 = vmatprep.mubr.f32.mxu0 0.0
    %973 = vmatmul.mubr.f32.gmra.mrb[0].mxu0 %v904
    %v974 = vpop.f32.mrb[0].mxu0
    %v975 = vadd.f32 %v897, %v974
    %v976 = vpop.f32.mrb[0].mxu0
    %977 = vmatprep.mubr.f32.mxu0 0.0
    %978 = vmatmul.mubr.f32.gmra.mrb[0].mxu0 %v906
    %v979 = vpop.f32.mrb[0].mxu0
    %v980 = vadd.f32 %v897, %v979
    %v981 = vpop.f32.mrb[0].mxu0
    %982 = vdwg.mxu0
    %983 = vst [vmem:[%s5] sm:$0xff] %v975
    %984 = vst [vmem:[%s5 + $0x8] sm:$0x3f] %v980
    %985 = vmax.xlane.f32.xlu0 %v975
    %v986 = vpop.xlane.xlu0 %985
    %v987 = vsel %vm890, %v980, -inf
    %988 = vmax.xlane.f32.xlu0 %v987
    %v989 = vpop.xlane.xlu0 %988
    %v990 = vsub.f32 %v975, %v986
    %v991 = vsub.f32 %v980, %v989
    %v992 = vmul.f32 %v990, 1.442695
    %v993 = vpow.pop %v992
    %v994 = vmul.f32 %v991, 1.442695
    %v995 = vpow.pop %v994
    %996 = vadd.xlane.f32.xlu0 %v993
    %v997 = vpop.xlane.xlu0 %996
    %v998 = vsel %vm890, %v995, 0.0
    %999 = vadd.xlane.f32.xlu0 %v998
    %v1000 = vpop.xlane.xlu0 %999
    %v1001 = vlog2.pop %v997
    %v1002 = vmul.f32 %v1001, 0.6931472
    %v1003 = vlog2.pop %v1000
    %v1004 = vmul.f32 %v1003, 0.6931472
    %v1005 = vadd.f32 %v986, %v1002
    %v1006 = vadd.f32 %v989, %v1004
    %1007 = vset.pattern.permute.xlu0 1
    %1008 = vperm.xlu0 %1007, %v242
    %v1009 = vpop.permute.xlu0 %1008
    %1010 = vset.pattern.permute.xlu0 1
    %1011 = vperm.xlu0 %1010, %v243
    %v1012 = vpop.permute.xlu0 %1011
    %vm1013 = vcmp.eq.s32.totalorder %v1009, %v140
    %vm1014 = vcmp.eq.s32.totalorder %v1012, %v140
    %v1015 = vsel %vm1013, 1, 0
    %v1016 = vsel %vm1014, 1, 0
    %v1017 = vcvt.s32.f32 %v1015
    %v1018 = vcvt.s32.f32 %v1016
    %v1019 = vmul.f32 %v1017, %v975
    %v1020 = vmul.f32 %v1018, %v980
    %1021 = vadd.xlane.f32.xlu0 %v1019
    %v1022 = vpop.xlane.xlu0 %1021
    %v1023 = vsel %vm890, %v1020, 0.0
    %1024 = vadd.xlane.f32.xlu0 %v1023
    %v1025 = vpop.xlane.xlu0 %1024
    %vm1026 = vcmp.ne.s32.totalorder %v242, 0
    %vm1027 = vcmp.ne.s32.totalorder %v243, 0
    %v1028 = vsel %vm1026, 1, 0
    %v1029 = vsel %vm1027, 1, 0
    %v1030 = vcvt.s32.f32 %v1028
    %v1031 = vcvt.s32.f32 %v1029
    %v1032 = vsub.f32 %v1005, %v1022
    %v1033 = vsub.f32 %v1006, %v1025
    %v1034 = vmul.f32 %v1030, %v1032
    %v1035 = vmul.f32 %v1031, %v1033
    %1038 = vrot.lane.b32.xlu0 %v1034, 127
    %v1039 = vpop.permute.xlu0 %1038
    %1040 = vrot.lane.b32.xlu0 %v1035, 127
    %v1041 = vpop.permute.xlu0 %1040
    %vm1044 = vcmask 7168
    %v1045 = vsel %vm1044, %v1039, 0.0
    %vm1046 = vcmask 5120
    %v1047 = vsel %vm1046, %v1041, 0.0
    %v1048 = vadd.f32 %v1045, %v1047
    %1049 = vadd.xlane.f32.xlu0 %v1048
    %v1050 = vpop.xlane.xlu0 %1049
    %v1051 = vrot.slane %v1050, 4
    %v1052 = vadd.f32 %v1050, %v1051
    %v1053 = vrot.slane %v1052, 2
    %v1054 = vadd.f32 %v1052, %v1053
    %v1055 = vrot.slane %v1054, 1
    %v1056 = vadd.f32 %v1054, %v1055
    %s1057 = vtos %v1056
    %1060 = vrot.lane.b32.xlu0 %v1030, 127
    %v1061 = vpop.permute.xlu0 %1060
    %1062 = vrot.lane.b32.xlu0 %v1031, 127
    %v1063 = vpop.permute.xlu0 %1062
    %v1066 = vsel %vm1044, %v1061, 0.0
    %v1067 = vsel %vm1046, %v1063, 0.0
    %v1068 = vadd.f32 %v1066, %v1067
    %1069 = vadd.xlane.f32.xlu0 %v1068
    %v1070 = vpop.xlane.xlu0 %1069
    %v1071 = vrot.slane %v1070, 4
    %v1072 = vadd.f32 %v1070, %v1071
    %v1073 = vrot.slane %v1072, 2
    %v1074 = vadd.f32 %v1072, %v1073
    %v1075 = vrot.slane %v1074, 1
    %v1076 = vadd.f32 %v1074, %v1075
    %s1077 = vtos %v1076
    %s1078 = smax.f32 %s1077, 1.0
    %v1079 = vstv %s1078
    %v1080 = vrcp.pop %v1079
    %s1081 = vtos %v1080
    %s1082 = smul.f32 %s1057, %s1081
    %s1083 = scalar_lea.smem [#allocation2], 0
    %1084 = sst [smem:[%s1083]] %s1082
    // Predicated region
    $region22: #{show_and_tell_forward.1} parent=1 // pred_check
      _
    $region23: #{show_and_tell_forward.1} parent=1 // pred_check_branch
      %1086 = sbr.rel (0) target = $region25
    $region24: #{show_and_tell_forward.1} parent=1 // pred_region
      _
    $region25: #{show_and_tell_forward.1} parent=1 // pred_fallthru
      _
    // Predicated region
    $region26: #{show_and_tell_forward.1} parent=1 // pred_check
      _
    $region27: #{show_and_tell_forward.1} parent=1 // pred_check_branch
      %1088 = sbr.rel (0) target = $region29
    $region28: #{show_and_tell_forward.1} parent=1 // pred_region
      %s1090 = ssub.s32 16, 16
      %1091 = vsyncadd [#allocation3], %s1090
      %1094 = dma.smem_to_hbm [#allocation2], 16, %s6, [#allocation3]
    $region29: #{show_and_tell_forward.1} parent=1 // pred_fallthru
      _
    // Predicated region
    $region30: #{show_and_tell_forward.1} parent=1 // pred_check
      _
    $region31: #{show_and_tell_forward.1} parent=1 // pred_check_branch
      %1096 = sbr.rel (0) target = $region33
    $region32: #{show_and_tell_forward.1} parent=1 // pred_region
      _
    $region33: #{show_and_tell_forward.1} parent=1 // pred_fallthru
      _
    // Predicated region
    $region34: #{show_and_tell_forward.1} parent=1 // pred_check
      _
    $region35: #{show_and_tell_forward.1} parent=1 // pred_check_branch
      %1098 = sbr.rel (0) target = $region37
    $region36: #{show_and_tell_forward.1} parent=1 // pred_region
      %1099 = dma.done [#allocation3], 16
    $region37: #{show_and_tell_forward.1} parent=1 // pred_fallthru
      _
    %1100 = sfence
    %1101 = vsyncpa [#allocation3], 1

</llo_original>
